<compile_context>
chip_gen: v5e
topology: v5e:2x2
jax: 0.10.0
libtpu: 0.0.40
codegen_flags: <defaults>
</compile_context>

<pallas_src>
import jax
import jax.numpy as jnp
from jax.experimental import pallas as pl
from jax.experimental.pallas import tpu as pltpu


# ----------------------------------------------------------------------------
# Fixed SRM filter bank (matches SRMConv2d_Separate._build_kernel)
# ----------------------------------------------------------------------------
def _srm_filter_bank():
    f1 = [[0, 0, 0, 0, 0],
          [0, -1, 2, -1, 0],
          [0, 2, -4, 2, 0],
          [0, -1, 2, -1, 0],
          [0, 0, 0, 0, 0]]
    f2 = [[-1, 2, -2, 2, -1],
          [2, -6, 8, -6, 2],
          [-2, 8, -12, 8, -2],
          [2, -6, 8, -6, 2],
          [-1, 2, -2, 2, -1]]
    f3 = [[0, 0, 0, 0, 0],
          [0, 0, 0, 0, 0],
          [0, 1, -2, 1, 0],
          [0, 0, 0, 0, 0],
          [0, 0, 0, 0, 0]]
    scales = (4.0, 12.0, 2.0)
    return [[[v / s for v in row] for row in filt]
            for filt, s in zip((f1, f2, f3), scales)]


# ----------------------------------------------------------------------------
# Fused SRM conv + Hardtanh + 1x1 conv + BN(eval) + ReLU kernel
# ----------------------------------------------------------------------------
def _make_srm_forward_kernel(cin, outc, tile_rows, width, filters):
    thw = tile_rows * width

    # Non-zero taps of each 5x5 filter, grouped by column offset dj so the
    # column-validity mask is applied once per group instead of once per tap.
    grouped = []
    for filt in filters:
        g = {}
        for di in range(5):
            for dj in range(5):
                v = float(filt[di][dj])
                if v != 0.0:
                    g.setdefault(dj, []).append((di, v))
        grouped.append(g)

    def kernel(x_ref, w_ref, b_ref, o_ref):
        # x_ref: (1, 1, cin, (tile_rows+4)*width + 4) flattened halo row-window
        x = x_ref[...][0, 0].astype(jnp.float32)            # (cin, WL)

        # Column index (within an image row) of every output lane of the tile.
        col = jax.lax.broadcasted_iota(jnp.int32, (1, thw), 1) % width
        masks = {
            d: ((col + d >= 0) & (col + d < width)).astype(jnp.float32)
            for d in (-2, -1, 1, 2)
        }

        # SRM depthwise 5x5 conv + Hardtanh(-3, 3); filter-major channel order.
        srm = []
        for g in grouped:
            acc = None
            for dj, taps in g.items():
                part = None
                for di, val in taps:
                    off = di * width + dj
                    term = val * x[:, off:off + thw]        # (cin, thw)
                    part = term if part is None else part + term
                d = dj - 2
                if d != 0:
                    part = part * masks[d]                  # zero out wrapped cols
                acc = part if acc is None else acc + part
            srm.append(jnp.clip(acc, -3.0, 3.0))

        # 1x1 conv (BN scale folded into weights) on the MXU, + BN shift, ReLU.
        w = w_ref[...].astype(jnp.float32)                  # (outc, 3*cin)
        y = None
        for f, block in enumerate(srm):                     # block: (cin, thw)
            part = jnp.dot(w[:, f * cin:(f + 1) * cin], block,
                           preferred_element_type=jnp.float32)
            y = part if y is None else y + part
        y = y + b_ref[...].astype(jnp.float32)              # (outc, thw) + (outc, 1)
        o_ref[...] = jnp.maximum(y, 0.0)[None].astype(o_ref.dtype)

    return kernel


def _pick_tile_rows(h, w, cin, outc, budget_bytes=4 << 20):
    """Largest row tile whose per-step working set stays inside a conservative
    VMEM budget (keeps double-buffered blocks well under the scoped defaults on
    v5e/v6e/v7x), preferring lane-dense (multiple-of-128) flattened tiles."""
    candidates = [th for th in range(1, h + 1)
                  if h % th == 0 and ((th * w) % 128 == 0 or th == h)]
    for th in sorted(candidates, reverse=True):
        step_bytes = 4 * (2 * cin * ((th + 4) * w + 4)   # double-buffered input
                          + 3 * cin * th * w             # clamped SRM maps
                          + 3 * outc * th * w)           # matmul result + out bufs
        if step_bytes <= budget_bytes:
            return th
    return min(candidates)


def srm_conv2d_separate_forward(x, w_1x1, bn_gamma, bn_beta, bn_mean, bn_var,
                                *, eps=1e-5, tile_rows=None):
    """Fused forward of SRMConv2d_Separate (inference-mode BatchNorm).

    x:      (N, inc, H, W)
    w_1x1:  (outc, 3*inc)  1x1 conv weight (trailing (1,1) dims squeezed)
    bn_*:   (outc,)        BatchNorm2d affine params / running stats
    Returns (N, outc, H, W).
    """
    n, cin, h, w = x.shape
    outc = w_1x1.shape[0]
    assert w_1x1.shape[1] == 3 * cin

    if tile_rows is None:
        tile_rows = _pick_tile_rows(h, w, cin, outc)
    th = int(tile_rows)
    assert h % th == 0 and ((th * w) % 128 == 0 or th == h), "bad row tile"
    num_t = h // th
    thw = th * w
    wl = (th + 4) * w + 4

    # Fold inference-mode BatchNorm into the 1x1 conv; reorder its columns to
    # the kernel's filter-major SRM-channel layout (f*cin + c  <-  3*c + f).
    scale = bn_gamma * jax.lax.rsqrt(bn_var + eps)
    w_eff = (w_1x1 * scale[:, None]).astype(jnp.float32)
    b_eff = (bn_beta - bn_mean * scale)[:, None].astype(jnp.float32)
    perm = jnp.asarray([3 * c + f for f in range(3) for c in range(cin)],
                       dtype=jnp.int32)
    w_eff = w_eff[:, perm]

    # Row-pad by 2, flatten spatial, add a +-2 element halo, and pre-stage the
    # overlapping per-row-tile windows so each grid step only DMAs its tile.
    xh = jnp.pad(x, ((0, 0), (0, 0), (2, 2), (0, 0)))
    xf = jnp.pad(xh.reshape(n, cin, (h + 4) * w), ((0, 0), (0, 0), (2, 2)))
    xw = jnp.stack([xf[:, :, t * thw: t * thw + wl] for t in range(num_t)],
                   axis=1)                                  # (n, num_t, cin, wl)

    kernel = _make_srm_forward_kernel(cin, outc, th, w, _srm_filter_bank())

    out = pl.pallas_call(
        kernel,
        out_shape=jax.ShapeDtypeStruct((n, outc, h * w), x.dtype),
        grid_spec=pltpu.PrefetchScalarGridSpec(
            num_scalar_prefetch=0,
            grid=(n, num_t),
            in_specs=[
                pl.BlockSpec((1, 1, cin, wl), lambda i, t: (i, t, 0, 0)),
                pl.BlockSpec((outc, 3 * cin), lambda i, t: (0, 0)),
                pl.BlockSpec((outc, 1), lambda i, t: (0, 0)),
            ],
            out_specs=pl.BlockSpec((1, outc, thw), lambda i, t: (i, 0, t)),
        ),
        compiler_params=pltpu.CompilerParams(
            dimension_semantics=("parallel", "parallel"),
        ),
    )(xw, w_eff, b_eff)

    return out.reshape(n, outc, h, w)


# ----------------------------------------------------------------------------
# ChannelAttention submodule (tiled reduction + fused shared MLP)
# ----------------------------------------------------------------------------
def _make_channel_attention_kernel(inv_hw, batch_tile):
    tn = batch_tile

    def kernel(x_ref, w1t_ref, w2t_ref, o_ref, sum_ref, max_ref, pool_ref):
        j = pl.program_id(1)

        @pl.when(j == 0)
        def _():
            sum_ref[...] = jnp.zeros_like(sum_ref)
            max_ref[...] = jnp.full_like(max_ref, -jnp.inf)

        xb = x_ref[...].astype(jnp.float32)                 # (TN, C, THW) tile
        sum_ref[...] += jnp.sum(xb, axis=-1)
        max_ref[...] = jnp.maximum(max_ref[...], jnp.max(xb, axis=-1))

        @pl.when(j == pl.num_programs(1) - 1)
        def _():
            # Stack [avg; max] so the shared MLP runs as ONE matmul per layer.
            pool_ref[0:tn, :] = sum_ref[...] * inv_hw
            pool_ref[tn:2 * tn, :] = max_ref[...]
            w1t = w1t_ref[...].astype(jnp.float32)          # (C, Ch)
            w2t = w2t_ref[...].astype(jnp.float32)          # (Ch, C)
            hid = jnp.maximum(
                jnp.dot(pool_ref[...], w1t, preferred_element_type=jnp.float32),
                0.0)                                        # (2*TN, Ch)
            y = jnp.dot(hid, w2t, preferred_element_type=jnp.float32)  # (2*TN, C)
            o_ref[...] = jax.nn.sigmoid(
                y[0:tn, :] + y[tn:2 * tn, :]).astype(o_ref.dtype)

    return kernel


def _pick_spatial_tile(hw, c, batch_tile, budget_bytes=4 << 20):
    candidates = [t for t in range(128, hw + 1, 128) if hw % t == 0]
    if not candidates:
        return hw                                  # tiny images: full-extent block
    for t in sorted(candidates, reverse=True):
        if 8 * batch_tile * c * t <= budget_bytes:  # 2 f32 input buffers
            return t
    return candidates[0]


def channel_attention(x_nchw, w1, w2, *, spatial_tile=None, batch_tile=None):
    """ChannelAttention forward: sigmoid(MLP(avgpool(x)) + MLP(maxpool(x))).

    x_nchw: (N, C, H, W); w1: (C//ratio, C); w2: (C, C//ratio).
    Returns (N, C, 1, 1).
    """
    n, c, h, w = x_nchw.shape
    ch = w1.shape[0]
    hw = h * w

    if batch_tile is None:
        batch_tile = next(d for d in (8, 4, 2, 1) if n % d == 0)
    if spatial_tile is None:
        spatial_tile = _pick_spatial_tile(hw, c, batch_tile)
    assert n % batch_tile == 0 and hw % spatial_tile == 0
    assert spatial_tile % 128 == 0 or spatial_tile == hw

    x_flat = x_nchw.reshape(n, c, hw)
    kernel = _make_channel_attention_kernel(1.0 / hw, batch_tile)

    out = pl.pallas_call(
        kernel,
        out_shape=jax.ShapeDtypeStruct((n, c), x_nchw.dtype),
        grid_spec=pltpu.PrefetchScalarGridSpec(
            num_scalar_prefetch=0,
            grid=(n // batch_tile, hw // spatial_tile),
            in_specs=[
                pl.BlockSpec((batch_tile, c, spatial_tile),
                             lambda b, j: (b, 0, j)),
                pl.BlockSpec((c, ch), lambda b, j: (0, 0)),
                pl.BlockSpec((ch, c), lambda b, j: (0, 0)),
            ],
            out_specs=pl.BlockSpec((batch_tile, c), lambda b, j: (b, 0)),
            scratch_shapes=[
                pltpu.VMEM((batch_tile, c), jnp.float32),       # running sum
                pltpu.VMEM((batch_tile, c), jnp.float32),       # running max
                pltpu.VMEM((2 * batch_tile, c), jnp.float32),   # stacked [avg; max]
            ],
        ),
        compiler_params=pltpu.CompilerParams(
            dimension_semantics=("parallel", "arbitrary"),
        ),
    )(x_flat, jnp.transpose(w1), jnp.transpose(w2))

    return out.reshape(n, c, 1, 1)


# ----------------------------------------------------------------------------
# Deterministic PyTorch-style initializers
# ----------------------------------------------------------------------------
def xavier_normal(key, shape_oihw, gain):
    o, i, kh, kw = shape_oihw
    fan_in, fan_out = i * kh * kw, o * kh * kw
    std = gain * (2.0 / (fan_in + fan_out)) ** 0.5
    return std * jax.random.normal(key, shape_oihw, dtype=jnp.float32)


if __name__ == "__main__":
    N, INC, H, W = 2, 3, 16, 16
    OUTC, RATIO = 32, 8
    CH = OUTC // RATIO

    key = jax.random.PRNGKey(0)
    kx, kconv, k1, k2 = jax.random.split(key, 4)

    x = jax.random.normal(kx, (N, INC, H, W), dtype=jnp.float32)

    # out_conv: Conv2d(3*inc, outc, 1, bias=False), kaiming_normal_(a=1)
    w_1x1 = jax.random.normal(kconv, (OUTC, 3 * INC), dtype=jnp.float32) \
        / jnp.sqrt(3.0 * INC)

    # BatchNorm2d(outc) at PyTorch defaults (inference-mode running stats).
    bn_gamma = jnp.ones((OUTC,), jnp.float32)
    bn_beta = jnp.zeros((OUTC,), jnp.float32)
    bn_mean = jnp.zeros((OUTC,), jnp.float32)
    bn_var = jnp.ones((OUTC,), jnp.float32)

    # ChannelAttention weights: xavier_normal_(gain=0.02) 1x1 convs, squeezed.
    ca_w1 = xavier_normal(k1, (CH, OUTC, 1, 1), gain=0.02)[:, :, 0, 0]   # (CH, OUTC)
    ca_w2 = xavier_normal(k2, (OUTC, CH, 1, 1), gain=0.02)[:, :, 0, 0]   # (OUTC, CH)

    # ---- Pallas forward (SRMConv2d_Separate.forward) ----
    out = srm_conv2d_separate_forward(
        x, w_1x1, bn_gamma, bn_beta, bn_mean, bn_var, tile_rows=8)
    out = jax.block_until_ready(out)

    # ---- ChannelAttention submodule (not called by .forward; demoed on out) ----
    att = channel_attention(out, ca_w1, ca_w2, spatial_tile=128)
    att = jax.block_until_ready(att)

    # ---- pure-JAX references ----
    hi = jax.lax.Precision.HIGHEST
    filt = jnp.asarray(_srm_filter_bank(), dtype=jnp.float32)            # (3, 5, 5)
    srm_w = jnp.tile(filt[:, None], (INC, 1, 1, 1))                      # (3*INC, 1, 5, 5)
    srm = jax.lax.conv_general_dilated(
        x, srm_w, window_strides=(1, 1), padding=((2, 2), (2, 2)),
        dimension_numbers=("NCHW", "OIHW", "NCHW"),
        feature_group_count=INC, precision=hi)
    srm = jnp.clip(srm, -3.0, 3.0)
    y = jnp.einsum("oc,nchw->nohw", w_1x1, srm, precision=hi)
    inv_std = jax.lax.rsqrt(bn_var + 1e-5)
    y = (y - bn_mean[None, :, None, None]) * inv_std[None, :, None, None]
    y = y * bn_gamma[None, :, None, None] + bn_beta[None, :, None, None]
    ref = jnp.maximum(y, 0.0)
    assert out.shape == ref.shape
    assert jnp.allclose(out, ref, atol=1e-3, rtol=1e-3), "SRM forward mismatch"

    avg = jnp.mean(out, axis=(2, 3))
    mx = jnp.max(out, axis=(2, 3))

    def mlp(v):
        hdn = jnp.maximum(jnp.dot(v, ca_w1.T, precision=hi), 0.0)
        return jnp.dot(hdn, ca_w2.T, precision=hi)

    att_ref = jax.nn.sigmoid(mlp(avg) + mlp(mx)).reshape(N, OUTC, 1, 1)
    assert jnp.allclose(att, att_ref, atol=1e-3, rtol=1e-3), "ChannelAttention mismatch"

    print("KERNEL_OK")
</pallas_src>

<mosaic_0001>
module attributes {stable_mosaic.version = 11 : i64} {
  func.func @kernel(%arg0: i32, %arg1: i32, %arg2: memref<1x1x3x196xf32, #tpu.memory_space<vmem>>, %arg3: memref<32x9xf32, #tpu.memory_space<vmem>>, %arg4: memref<32x1xf32, #tpu.memory_space<vmem>>, %arg5: memref<1x32x128xf32, #tpu.memory_space<vmem>>) attributes {dimension_semantics = [#tpu.dimension_semantics<parallel>, #tpu.dimension_semantics<parallel>], iteration_bounds = array<i64: 2, 2>, scalar_prefetch = 0 : i64, scratch_operands = 0 : i64, tpu.core_type = #tpu.core_type<tc>, window_params = [{transform_indices = @transform_0, window_bounds = array<i64: 1, 1, 3, 196>}, {pipeline_mode = #tpu.pipeline_mode<synchronous>, transform_indices = @transform_1, window_bounds = array<i64: 32, 9>}, {pipeline_mode = #tpu.pipeline_mode<synchronous>, transform_indices = @transform_2, window_bounds = array<i64: 32, 1>}, {transform_indices = @transform_3, window_bounds = array<i64: 1, 32, 128>}]} {
    %c0 = arith.constant 0 : index
    %c0_0 = arith.constant 0 : index
    %c0_1 = arith.constant 0 : index
    %c0_2 = arith.constant 0 : index
    %0 = vector.load %arg2[%c0, %c0_0, %c0_1, %c0_2] : memref<1x1x3x196xf32, #tpu.memory_space<vmem>>, vector<1x1x3x196xf32>
    %1 = vector.shape_cast %0 : vector<1x1x3x196xf32> to vector<3x196xf32>
    %2 = tpu.iota {dimensions = array<i32: 1>} : vector<1x128xi32>
    %c16_i32 = arith.constant 16 : i32
    %c0_i32 = arith.constant 0 : i32
    %3 = arith.cmpi eq, %c16_i32, %c0_i32 : i32
    %c1_i32 = arith.constant 1 : i32
    %4 = arith.select %3, %c1_i32, %c16_i32 : i32
    %5 = vector.broadcast %4 : i32 to vector<1x128xi32>
    %6 = arith.remsi %2, %5 : vector<1x128xi32>
    %c0_i32_3 = arith.constant 0 : i32
    %7 = vector.broadcast %c0_i32_3 : i32 to vector<1x128xi32>
    %8 = arith.cmpi ne, %6, %7 : vector<1x128xi32>
    %c0_i32_4 = arith.constant 0 : i32
    %9 = vector.broadcast %c0_i32_4 : i32 to vector<1x128xi32>
    %10 = arith.cmpi slt, %6, %9 : vector<1x128xi32>
    %c0_i32_5 = arith.constant 0 : i32
    %11 = arith.cmpi slt, %4, %c0_i32_5 : i32
    %12 = vector.broadcast %11 : i1 to vector<1x128xi1>
    %13 = vector.broadcast %12 : vector<1x128xi1> to vector<1x128xi1>
    %14 = arith.xori %10, %13 : vector<1x128xi1>
    %15 = arith.andi %14, %8 : vector<1x128xi1>
    %16 = vector.broadcast %4 : i32 to vector<1x128xi32>
    %17 = arith.addi %6, %16 : vector<1x128xi32>
    %18 = arith.select %15, %17, %6 : vector<1x128xi1>, vector<1x128xi32>
    %c-2_i32 = arith.constant -2 : i32
    %19 = vector.broadcast %c-2_i32 : i32 to vector<1x128xi32>
    %20 = arith.addi %18, %19 : vector<1x128xi32>
    %c0_i32_6 = arith.constant 0 : i32
    %21 = vector.broadcast %c0_i32_6 : i32 to vector<1x128xi32>
    %22 = arith.cmpi sge, %20, %21 : vector<1x128xi32>
    %c-2_i32_7 = arith.constant -2 : i32
    %23 = vector.broadcast %c-2_i32_7 : i32 to vector<1x128xi32>
    %24 = arith.addi %18, %23 : vector<1x128xi32>
    %c16_i32_8 = arith.constant 16 : i32
    %25 = vector.broadcast %c16_i32_8 : i32 to vector<1x128xi32>
    %26 = arith.cmpi slt, %24, %25 : vector<1x128xi32>
    %27 = arith.andi %22, %26 : vector<1x128xi1>
    %28 = arith.extui %27 : vector<1x128xi1> to vector<1x128xi32>
    %29 = arith.sitofp %28 : vector<1x128xi32> to vector<1x128xf32>
    %c-1_i32 = arith.constant -1 : i32
    %30 = vector.broadcast %c-1_i32 : i32 to vector<1x128xi32>
    %31 = arith.addi %18, %30 : vector<1x128xi32>
    %c0_i32_9 = arith.constant 0 : i32
    %32 = vector.broadcast %c0_i32_9 : i32 to vector<1x128xi32>
    %33 = arith.cmpi sge, %31, %32 : vector<1x128xi32>
    %c-1_i32_10 = arith.constant -1 : i32
    %34 = vector.broadcast %c-1_i32_10 : i32 to vector<1x128xi32>
    %35 = arith.addi %18, %34 : vector<1x128xi32>
    %c16_i32_11 = arith.constant 16 : i32
    %36 = vector.broadcast %c16_i32_11 : i32 to vector<1x128xi32>
    %37 = arith.cmpi slt, %35, %36 : vector<1x128xi32>
    %38 = arith.andi %33, %37 : vector<1x128xi1>
    %39 = arith.extui %38 : vector<1x128xi1> to vector<1x128xi32>
    %40 = arith.sitofp %39 : vector<1x128xi32> to vector<1x128xf32>
    %c1_i32_12 = arith.constant 1 : i32
    %41 = vector.broadcast %c1_i32_12 : i32 to vector<1x128xi32>
    %42 = arith.addi %18, %41 : vector<1x128xi32>
    %c0_i32_13 = arith.constant 0 : i32
    %43 = vector.broadcast %c0_i32_13 : i32 to vector<1x128xi32>
    %44 = arith.cmpi sge, %42, %43 : vector<1x128xi32>
    %c1_i32_14 = arith.constant 1 : i32
    %45 = vector.broadcast %c1_i32_14 : i32 to vector<1x128xi32>
    %46 = arith.addi %18, %45 : vector<1x128xi32>
    %c16_i32_15 = arith.constant 16 : i32
    %47 = vector.broadcast %c16_i32_15 : i32 to vector<1x128xi32>
    %48 = arith.cmpi slt, %46, %47 : vector<1x128xi32>
    %49 = arith.andi %44, %48 : vector<1x128xi1>
    %50 = arith.extui %49 : vector<1x128xi1> to vector<1x128xi32>
    %51 = arith.sitofp %50 : vector<1x128xi32> to vector<1x128xf32>
    %c2_i32 = arith.constant 2 : i32
    %52 = vector.broadcast %c2_i32 : i32 to vector<1x128xi32>
    %53 = arith.addi %18, %52 : vector<1x128xi32>
    %c0_i32_16 = arith.constant 0 : i32
    %54 = vector.broadcast %c0_i32_16 : i32 to vector<1x128xi32>
    %55 = arith.cmpi sge, %53, %54 : vector<1x128xi32>
    %c2_i32_17 = arith.constant 2 : i32
    %56 = vector.broadcast %c2_i32_17 : i32 to vector<1x128xi32>
    %57 = arith.addi %18, %56 : vector<1x128xi32>
    %c16_i32_18 = arith.constant 16 : i32
    %58 = vector.broadcast %c16_i32_18 : i32 to vector<1x128xi32>
    %59 = arith.cmpi slt, %57, %58 : vector<1x128xi32>
    %60 = arith.andi %55, %59 : vector<1x128xi1>
    %61 = arith.extui %60 : vector<1x128xi1> to vector<1x128xi32>
    %62 = arith.sitofp %61 : vector<1x128xi32> to vector<1x128xf32>
    %63 = vector.extract_strided_slice %1 {offsets = [0, 17], sizes = [3, 128], strides = [1, 1]} : vector<3x196xf32> to vector<3x128xf32>
    %cst = arith.constant -2.500000e-01 : f32
    %64 = vector.broadcast %cst : f32 to vector<3x128xf32>
    %65 = arith.mulf %64, %63 : vector<3x128xf32>
    %66 = vector.extract_strided_slice %1 {offsets = [0, 33], sizes = [3, 128], strides = [1, 1]} : vector<3x196xf32> to vector<3x128xf32>
    %cst_19 = arith.constant 5.000000e-01 : f32
    %67 = vector.broadcast %cst_19 : f32 to vector<3x128xf32>
    %68 = arith.mulf %67, %66 : vector<3x128xf32>
    %69 = arith.addf %65, %68 : vector<3x128xf32>
    %70 = vector.extract_strided_slice %1 {offsets = [0, 49], sizes = [3, 128], strides = [1, 1]} : vector<3x196xf32> to vector<3x128xf32>
    %cst_20 = arith.constant -2.500000e-01 : f32
    %71 = vector.broadcast %cst_20 : f32 to vector<3x128xf32>
    %72 = arith.mulf %71, %70 : vector<3x128xf32>
    %73 = arith.addf %69, %72 : vector<3x128xf32>
    %74 = vector.broadcast %40 : vector<1x128xf32> to vector<3x128xf32>
    %75 = arith.mulf %73, %74 : vector<3x128xf32>
    %76 = vector.extract_strided_slice %1 {offsets = [0, 18], sizes = [3, 128], strides = [1, 1]} : vector<3x196xf32> to vector<3x128xf32>
    %cst_21 = arith.constant 5.000000e-01 : f32
    %77 = vector.broadcast %cst_21 : f32 to vector<3x128xf32>
    %78 = arith.mulf %77, %76 : vector<3x128xf32>
    %79 = vector.extract_strided_slice %1 {offsets = [0, 34], sizes = [3, 128], strides = [1, 1]} : vector<3x196xf32> to vector<3x128xf32>
    %cst_22 = arith.constant -1.000000e+00 : f32
    %80 = vector.broadcast %cst_22 : f32 to vector<3x128xf32>
    %81 = arith.mulf %80, %79 : vector<3x128xf32>
    %82 = arith.addf %78, %81 : vector<3x128xf32>
    %83 = vector.extract_strided_slice %1 {offsets = [0, 50], sizes = [3, 128], strides = [1, 1]} : vector<3x196xf32> to vector<3x128xf32>
    %cst_23 = arith.constant 5.000000e-01 : f32
    %84 = vector.broadcast %cst_23 : f32 to vector<3x128xf32>
    %85 = arith.mulf %84, %83 : vector<3x128xf32>
    %86 = arith.addf %82, %85 : vector<3x128xf32>
    %87 = arith.addf %75, %86 : vector<3x128xf32>
    %88 = vector.extract_strided_slice %1 {offsets = [0, 19], sizes = [3, 128], strides = [1, 1]} : vector<3x196xf32> to vector<3x128xf32>
    %cst_24 = arith.constant -2.500000e-01 : f32
    %89 = vector.broadcast %cst_24 : f32 to vector<3x128xf32>
    %90 = arith.mulf %89, %88 : vector<3x128xf32>
    %91 = vector.extract_strided_slice %1 {offsets = [0, 35], sizes = [3, 128], strides = [1, 1]} : vector<3x196xf32> to vector<3x128xf32>
    %cst_25 = arith.constant 5.000000e-01 : f32
    %92 = vector.broadcast %cst_25 : f32 to vector<3x128xf32>
    %93 = arith.mulf %92, %91 : vector<3x128xf32>
    %94 = arith.addf %90, %93 : vector<3x128xf32>
    %95 = vector.extract_strided_slice %1 {offsets = [0, 51], sizes = [3, 128], strides = [1, 1]} : vector<3x196xf32> to vector<3x128xf32>
    %cst_26 = arith.constant -2.500000e-01 : f32
    %96 = vector.broadcast %cst_26 : f32 to vector<3x128xf32>
    %97 = arith.mulf %96, %95 : vector<3x128xf32>
    %98 = arith.addf %94, %97 : vector<3x128xf32>
    %99 = vector.broadcast %51 : vector<1x128xf32> to vector<3x128xf32>
    %100 = arith.mulf %98, %99 : vector<3x128xf32>
    %101 = arith.addf %87, %100 : vector<3x128xf32>
    %cst_27 = arith.constant -3.000000e+00 : f32
    %cst_28 = arith.constant 3.000000e+00 : f32
    %102 = vector.broadcast %cst_27 : f32 to vector<3x128xf32>
    %103 = arith.maximumf %102, %101 : vector<3x128xf32>
    %104 = vector.broadcast %cst_28 : f32 to vector<3x128xf32>
    %105 = arith.minimumf %104, %103 : vector<3x128xf32>
    %106 = vector.extract_strided_slice %1 {offsets = [0, 0], sizes = [3, 128], strides = [1, 1]} : vector<3x196xf32> to vector<3x128xf32>
    %cst_29 = arith.constant -0.0833333358 : f32
    %107 = vector.broadcast %cst_29 : f32 to vector<3x128xf32>
    %108 = arith.mulf %107, %106 : vector<3x128xf32>
    %109 = vector.extract_strided_slice %1 {offsets = [0, 16], sizes = [3, 128], strides = [1, 1]} : vector<3x196xf32> to vector<3x128xf32>
    %cst_30 = arith.constant 0.166666672 : f32
    %110 = vector.broadcast %cst_30 : f32 to vector<3x128xf32>
    %111 = arith.mulf %110, %109 : vector<3x128xf32>
    %112 = arith.addf %108, %111 : vector<3x128xf32>
    %113 = vector.extract_strided_slice %1 {offsets = [0, 32], sizes = [3, 128], strides = [1, 1]} : vector<3x196xf32> to vector<3x128xf32>
    %cst_31 = arith.constant -0.166666672 : f32
    %114 = vector.broadcast %cst_31 : f32 to vector<3x128xf32>
    %115 = arith.mulf %114, %113 : vector<3x128xf32>
    %116 = arith.addf %112, %115 : vector<3x128xf32>
    %117 = vector.extract_strided_slice %1 {offsets = [0, 48], sizes = [3, 128], strides = [1, 1]} : vector<3x196xf32> to vector<3x128xf32>
    %cst_32 = arith.constant 0.166666672 : f32
    %118 = vector.broadcast %cst_32 : f32 to vector<3x128xf32>
    %119 = arith.mulf %118, %117 : vector<3x128xf32>
    %120 = arith.addf %116, %119 : vector<3x128xf32>
    %121 = vector.extract_strided_slice %1 {offsets = [0, 64], sizes = [3, 128], strides = [1, 1]} : vector<3x196xf32> to vector<3x128xf32>
    %cst_33 = arith.constant -0.0833333358 : f32
    %122 = vector.broadcast %cst_33 : f32 to vector<3x128xf32>
    %123 = arith.mulf %122, %121 : vector<3x128xf32>
    %124 = arith.addf %120, %123 : vector<3x128xf32>
    %125 = vector.broadcast %29 : vector<1x128xf32> to vector<3x128xf32>
    %126 = arith.mulf %124, %125 : vector<3x128xf32>
    %127 = vector.extract_strided_slice %1 {offsets = [0, 1], sizes = [3, 128], strides = [1, 1]} : vector<3x196xf32> to vector<3x128xf32>
    %cst_34 = arith.constant 0.166666672 : f32
    %128 = vector.broadcast %cst_34 : f32 to vector<3x128xf32>
    %129 = arith.mulf %128, %127 : vector<3x128xf32>
    %130 = vector.extract_strided_slice %1 {offsets = [0, 17], sizes = [3, 128], strides = [1, 1]} : vector<3x196xf32> to vector<3x128xf32>
    %cst_35 = arith.constant -5.000000e-01 : f32
    %131 = vector.broadcast %cst_35 : f32 to vector<3x128xf32>
    %132 = arith.mulf %131, %130 : vector<3x128xf32>
    %133 = arith.addf %129, %132 : vector<3x128xf32>
    %134 = vector.extract_strided_slice %1 {offsets = [0, 33], sizes = [3, 128], strides = [1, 1]} : vector<3x196xf32> to vector<3x128xf32>
    %cst_36 = arith.constant 0.666666686 : f32
    %135 = vector.broadcast %cst_36 : f32 to vector<3x128xf32>
    %136 = arith.mulf %135, %134 : vector<3x128xf32>
    %137 = arith.addf %133, %136 : vector<3x128xf32>
    %138 = vector.extract_strided_slice %1 {offsets = [0, 49], sizes = [3, 128], strides = [1, 1]} : vector<3x196xf32> to vector<3x128xf32>
    %cst_37 = arith.constant -5.000000e-01 : f32
    %139 = vector.broadcast %cst_37 : f32 to vector<3x128xf32>
    %140 = arith.mulf %139, %138 : vector<3x128xf32>
    %141 = arith.addf %137, %140 : vector<3x128xf32>
    %142 = vector.extract_strided_slice %1 {offsets = [0, 65], sizes = [3, 128], strides = [1, 1]} : vector<3x196xf32> to vector<3x128xf32>
    %cst_38 = arith.constant 0.166666672 : f32
    %143 = vector.broadcast %cst_38 : f32 to vector<3x128xf32>
    %144 = arith.mulf %143, %142 : vector<3x128xf32>
    %145 = arith.addf %141, %144 : vector<3x128xf32>
    %146 = vector.broadcast %40 : vector<1x128xf32> to vector<3x128xf32>
    %147 = arith.mulf %145, %146 : vector<3x128xf32>
    %148 = arith.addf %126, %147 : vector<3x128xf32>
    %149 = vector.extract_strided_slice %1 {offsets = [0, 2], sizes = [3, 128], strides = [1, 1]} : vector<3x196xf32> to vector<3x128xf32>
    %cst_39 = arith.constant -0.166666672 : f32
    %150 = vector.broadcast %cst_39 : f32 to vector<3x128xf32>
    %151 = arith.mulf %150, %149 : vector<3x128xf32>
    %152 = vector.extract_strided_slice %1 {offsets = [0, 18], sizes = [3, 128], strides = [1, 1]} : vector<3x196xf32> to vector<3x128xf32>
    %cst_40 = arith.constant 0.666666686 : f32
    %153 = vector.broadcast %cst_40 : f32 to vector<3x128xf32>
    %154 = arith.mulf %153, %152 : vector<3x128xf32>
    %155 = arith.addf %151, %154 : vector<3x128xf32>
    %156 = vector.extract_strided_slice %1 {offsets = [0, 34], sizes = [3, 128], strides = [1, 1]} : vector<3x196xf32> to vector<3x128xf32>
    %cst_41 = arith.constant -1.000000e+00 : f32
    %157 = vector.broadcast %cst_41 : f32 to vector<3x128xf32>
    %158 = arith.mulf %157, %156 : vector<3x128xf32>
    %159 = arith.addf %155, %158 : vector<3x128xf32>
    %160 = vector.extract_strided_slice %1 {offsets = [0, 50], sizes = [3, 128], strides = [1, 1]} : vector<3x196xf32> to vector<3x128xf32>
    %cst_42 = arith.constant 0.666666686 : f32
    %161 = vector.broadcast %cst_42 : f32 to vector<3x128xf32>
    %162 = arith.mulf %161, %160 : vector<3x128xf32>
    %163 = arith.addf %159, %162 : vector<3x128xf32>
    %164 = vector.extract_strided_slice %1 {offsets = [0, 66], sizes = [3, 128], strides = [1, 1]} : vector<3x196xf32> to vector<3x128xf32>
    %cst_43 = arith.constant -0.166666672 : f32
    %165 = vector.broadcast %cst_43 : f32 to vector<3x128xf32>
    %166 = arith.mulf %165, %164 : vector<3x128xf32>
    %167 = arith.addf %163, %166 : vector<3x128xf32>
    %168 = arith.addf %148, %167 : vector<3x128xf32>
    %169 = vector.extract_strided_slice %1 {offsets = [0, 3], sizes = [3, 128], strides = [1, 1]} : vector<3x196xf32> to vector<3x128xf32>
    %cst_44 = arith.constant 0.166666672 : f32
    %170 = vector.broadcast %cst_44 : f32 to vector<3x128xf32>
    %171 = arith.mulf %170, %169 : vector<3x128xf32>
    %172 = vector.extract_strided_slice %1 {offsets = [0, 19], sizes = [3, 128], strides = [1, 1]} : vector<3x196xf32> to vector<3x128xf32>
    %cst_45 = arith.constant -5.000000e-01 : f32
    %173 = vector.broadcast %cst_45 : f32 to vector<3x128xf32>
    %174 = arith.mulf %173, %172 : vector<3x128xf32>
    %175 = arith.addf %171, %174 : vector<3x128xf32>
    %176 = vector.extract_strided_slice %1 {offsets = [0, 35], sizes = [3, 128], strides = [1, 1]} : vector<3x196xf32> to vector<3x128xf32>
    %cst_46 = arith.constant 0.666666686 : f32
    %177 = vector.broadcast %cst_46 : f32 to vector<3x128xf32>
    %178 = arith.mulf %177, %176 : vector<3x128xf32>
    %179 = arith.addf %175, %178 : vector<3x128xf32>
    %180 = vector.extract_strided_slice %1 {offsets = [0, 51], sizes = [3, 128], strides = [1, 1]} : vector<3x196xf32> to vector<3x128xf32>
    %cst_47 = arith.constant -5.000000e-01 : f32
    %181 = vector.broadcast %cst_47 : f32 to vector<3x128xf32>
    %182 = arith.mulf %181, %180 : vector<3x128xf32>
    %183 = arith.addf %179, %182 : vector<3x128xf32>
    %184 = vector.extract_strided_slice %1 {offsets = [0, 67], sizes = [3, 128], strides = [1, 1]} : vector<3x196xf32> to vector<3x128xf32>
    %cst_48 = arith.constant 0.166666672 : f32
    %185 = vector.broadcast %cst_48 : f32 to vector<3x128xf32>
    %186 = arith.mulf %185, %184 : vector<3x128xf32>
    %187 = arith.addf %183, %186 : vector<3x128xf32>
    %188 = vector.broadcast %51 : vector<1x128xf32> to vector<3x128xf32>
    %189 = arith.mulf %187, %188 : vector<3x128xf32>
    %190 = arith.addf %168, %189 : vector<3x128xf32>
    %191 = vector.extract_strided_slice %1 {offsets = [0, 4], sizes = [3, 128], strides = [1, 1]} : vector<3x196xf32> to vector<3x128xf32>
    %cst_49 = arith.constant -0.0833333358 : f32
    %192 = vector.broadcast %cst_49 : f32 to vector<3x128xf32>
    %193 = arith.mulf %192, %191 : vector<3x128xf32>
    %194 = vector.extract_strided_slice %1 {offsets = [0, 20], sizes = [3, 128], strides = [1, 1]} : vector<3x196xf32> to vector<3x128xf32>
    %cst_50 = arith.constant 0.166666672 : f32
    %195 = vector.broadcast %cst_50 : f32 to vector<3x128xf32>
    %196 = arith.mulf %195, %194 : vector<3x128xf32>
    %197 = arith.addf %193, %196 : vector<3x128xf32>
    %198 = vector.extract_strided_slice %1 {offsets = [0, 36], sizes = [3, 128], strides = [1, 1]} : vector<3x196xf32> to vector<3x128xf32>
    %cst_51 = arith.constant -0.166666672 : f32
    %199 = vector.broadcast %cst_51 : f32 to vector<3x128xf32>
    %200 = arith.mulf %199, %198 : vector<3x128xf32>
    %201 = arith.addf %197, %200 : vector<3x128xf32>
    %202 = vector.extract_strided_slice %1 {offsets = [0, 52], sizes = [3, 128], strides = [1, 1]} : vector<3x196xf32> to vector<3x128xf32>
    %cst_52 = arith.constant 0.166666672 : f32
    %203 = vector.broadcast %cst_52 : f32 to vector<3x128xf32>
    %204 = arith.mulf %203, %202 : vector<3x128xf32>
    %205 = arith.addf %201, %204 : vector<3x128xf32>
    %206 = vector.extract_strided_slice %1 {offsets = [0, 68], sizes = [3, 128], strides = [1, 1]} : vector<3x196xf32> to vector<3x128xf32>
    %cst_53 = arith.constant -0.0833333358 : f32
    %207 = vector.broadcast %cst_53 : f32 to vector<3x128xf32>
    %208 = arith.mulf %207, %206 : vector<3x128xf32>
    %209 = arith.addf %205, %208 : vector<3x128xf32>
    %210 = vector.broadcast %62 : vector<1x128xf32> to vector<3x128xf32>
    %211 = arith.mulf %209, %210 : vector<3x128xf32>
    %212 = arith.addf %190, %211 : vector<3x128xf32>
    %cst_54 = arith.constant -3.000000e+00 : f32
    %cst_55 = arith.constant 3.000000e+00 : f32
    %213 = vector.broadcast %cst_54 : f32 to vector<3x128xf32>
    %214 = arith.maximumf %213, %212 : vector<3x128xf32>
    %215 = vector.broadcast %cst_55 : f32 to vector<3x128xf32>
    %216 = arith.minimumf %215, %214 : vector<3x128xf32>
    %217 = vector.extract_strided_slice %1 {offsets = [0, 33], sizes = [3, 128], strides = [1, 1]} : vector<3x196xf32> to vector<3x128xf32>
    %cst_56 = arith.constant 5.000000e-01 : f32
    %218 = vector.broadcast %cst_56 : f32 to vector<3x128xf32>
    %219 = arith.mulf %218, %217 : vector<3x128xf32>
    %220 = vector.broadcast %40 : vector<1x128xf32> to vector<3x128xf32>
    %221 = arith.mulf %219, %220 : vector<3x128xf32>
    %222 = vector.extract_strided_slice %1 {offsets = [0, 34], sizes = [3, 128], strides = [1, 1]} : vector<3x196xf32> to vector<3x128xf32>
    %cst_57 = arith.constant -1.000000e+00 : f32
    %223 = vector.broadcast %cst_57 : f32 to vector<3x128xf32>
    %224 = arith.mulf %223, %222 : vector<3x128xf32>
    %225 = arith.addf %221, %224 : vector<3x128xf32>
    %226 = vector.extract_strided_slice %1 {offsets = [0, 35], sizes = [3, 128], strides = [1, 1]} : vector<3x196xf32> to vector<3x128xf32>
    %cst_58 = arith.constant 5.000000e-01 : f32
    %227 = vector.broadcast %cst_58 : f32 to vector<3x128xf32>
    %228 = arith.mulf %227, %226 : vector<3x128xf32>
    %229 = vector.broadcast %51 : vector<1x128xf32> to vector<3x128xf32>
    %230 = arith.mulf %228, %229 : vector<3x128xf32>
    %231 = arith.addf %225, %230 : vector<3x128xf32>
    %cst_59 = arith.constant -3.000000e+00 : f32
    %cst_60 = arith.constant 3.000000e+00 : f32
    %232 = vector.broadcast %cst_59 : f32 to vector<3x128xf32>
    %233 = arith.maximumf %232, %231 : vector<3x128xf32>
    %234 = vector.broadcast %cst_60 : f32 to vector<3x128xf32>
    %235 = arith.minimumf %234, %233 : vector<3x128xf32>
    %c0_61 = arith.constant 0 : index
    %c0_62 = arith.constant 0 : index
    %236 = vector.load %arg3[%c0_61, %c0_62] : memref<32x9xf32, #tpu.memory_space<vmem>>, vector<32x9xf32>
    %237 = vector.extract_strided_slice %236 {offsets = [0, 0], sizes = [32, 3], strides = [1, 1]} : vector<32x9xf32> to vector<32x3xf32>
    %cst_63 = arith.constant dense<0.000000e+00> : vector<32x128xf32>
    %238 = tpu.matmul %237, %105, %cst_63 {dimension_numbers = #tpu.dot_dimension_numbers<[1], [0], [0], [1], [0, 0, 1, 1], [], []>} : vector<32x3xf32>, vector<3x128xf32>, vector<32x128xf32> -> vector<32x128xf32>
    %239 = vector.extract_strided_slice %236 {offsets = [0, 3], sizes = [32, 3], strides = [1, 1]} : vector<32x9xf32> to vector<32x3xf32>
    %cst_64 = arith.constant dense<0.000000e+00> : vector<32x128xf32>
    %240 = tpu.matmul %239, %216, %cst_64 {dimension_numbers = #tpu.dot_dimension_numbers<[1], [0], [0], [1], [0, 0, 1, 1], [], []>} : vector<32x3xf32>, vector<3x128xf32>, vector<32x128xf32> -> vector<32x128xf32>
    %241 = arith.addf %238, %240 : vector<32x128xf32>
    %242 = vector.extract_strided_slice %236 {offsets = [0, 6], sizes = [32, 3], strides = [1, 1]} : vector<32x9xf32> to vector<32x3xf32>
    %cst_65 = arith.constant dense<0.000000e+00> : vector<32x128xf32>
    %243 = tpu.matmul %242, %235, %cst_65 {dimension_numbers = #tpu.dot_dimension_numbers<[1], [0], [0], [1], [0, 0, 1, 1], [], []>} : vector<32x3xf32>, vector<3x128xf32>, vector<32x128xf32> -> vector<32x128xf32>
    %244 = arith.addf %241, %243 : vector<32x128xf32>
    %c0_66 = arith.constant 0 : index
    %c0_67 = arith.constant 0 : index
    %245 = vector.load %arg4[%c0_66, %c0_67] : memref<32x1xf32, #tpu.memory_space<vmem>>, vector<32x1xf32>
    %246 = vector.broadcast %245 : vector<32x1xf32> to vector<32x128xf32>
    %247 = arith.addf %244, %246 : vector<32x128xf32>
    %cst_68 = arith.constant 0.000000e+00 : f32
    %248 = vector.broadcast %cst_68 : f32 to vector<32x128xf32>
    %249 = arith.maximumf %247, %248 : vector<32x128xf32>
    %250 = vector.shape_cast %249 : vector<32x128xf32> to vector<1x32x128xf32>
    %c0_69 = arith.constant 0 : index
    %c0_70 = arith.constant 0 : index
    %c0_71 = arith.constant 0 : index
    %251 = vector.load %arg5[%c0_69, %c0_70, %c0_71] : memref<1x32x128xf32, #tpu.memory_space<vmem>>, vector<1x32x128xf32>
    tpu.vector_store %arg5[%c0_69, %c0_70, %c0_71], %250 {strides = array<i32>} : memref<1x32x128xf32, #tpu.memory_space<vmem>>, vector<1x32x128xf32>,
    return
  }
  func.func @transform_0(%arg0: i32, %arg1: i32) -> (i32, i32, i32, i32) {
    %c0_i32 = arith.constant 0 : i32
    %c0_i32_0 = arith.constant 0 : i32
    %c0_i32_1 = arith.constant 0 : i32
    return %arg0, %arg1, %c0_i32, %c0_i32_0 : i32, i32, i32, i32
  }
  func.func @transform_1(%arg0: i32, %arg1: i32) -> (i32, i32) {
    %c0_i32 = arith.constant 0 : i32
    %c0_i32_0 = arith.constant 0 : i32
    %c0_i32_1 = arith.constant 0 : i32
    return %c0_i32, %c0_i32_0 : i32, i32
  }
  func.func @transform_2(%arg0: i32, %arg1: i32) -> (i32, i32) {
    %c0_i32 = arith.constant 0 : i32
    %c0_i32_0 = arith.constant 0 : i32
    %c0_i32_1 = arith.constant 0 : i32
    return %c0_i32, %c0_i32_0 : i32, i32
  }
  func.func @transform_3(%arg0: i32, %arg1: i32) -> (i32, i32, i32) {
    %c0_i32 = arith.constant 0 : i32
    %c0_i32_0 = arith.constant 0 : i32
    return %arg0, %c0_i32, %arg1 : i32, i32, i32
  }
}

</mosaic_0001>

<llo_original>
// kernel: tpu_custom_call.1
$region0: #{tpu_custom_call.1}
  #allocation0 [shape = 'u32[]', space=smem, size = 0x4, offset = 0x4, fixed_abs, tag = 'smem constant byte address 0x4 - core index']
  #allocation1 [shape = 'u32[72,128]{1,0:T(1,128)}', space=vmem, size = 0x9000, scoped, tag = 'internal scratch']
  %s0 = inlined_call_operand.vmem [shape: f32[2,2,3,196], index: 0, kind: input, shape index: {}]
  %s1 = inlined_call_operand.vmem [shape: f32[32,9], index: 1, kind: input, shape index: {}]
  %s2 = inlined_call_operand.vmem [shape: f32[32,1], index: 2, kind: input, shape index: {}]
  %s3 = inlined_call_operand.hbm [shape: f32[2,32,256], index: 3, kind: output, shape index: {}]
  %s4 = sld [smem:[#allocation0]]
  $region45: #{tpu_custom_call.1} parent=0
    _
  %s6 = ssub.s32 1, %s4
  %s7 = scalar_select 0, %s6, %s4
  $region1: #{tpu_custom_call.1} parent=0
    #allocation2 [shape = 'u8[32768]{0}', space=vmem, size = 0x8000, scoped, tag = 'output window, operand 0']
    #allocation3 [shape = 's32[2]{0}', space=sflag, size = 0x8, scoped, tag = 'scoped memory for tpu_custom_call.1']
    %8 = vsyncpa [#allocation3], 0
    %s9 = scalar_lea.sflag [#allocation3], 1
    %10 = vsyncpa %s9, 0
    loop: start=0, step=1, limit=6
    $region2: #{tpu_custom_call.1} parent=1 // loop_pre_header
      _
    $region3: #{tpu_custom_call.1} parent=1 // loop_header
      %s12 = sphi 0, %s16
      %p13 = scmp.ge.s32.totalorder %s12, 6
      %s19 = sphi 0, %s31
      %s20 = sphi 0, %s27
      %s21 = sphi 0, %s19
      %s22 = sphi 0, %s20
      %s23 = sphi 0, %s21
      %s24 = sphi 0, %s22
      %s36 = sphi 0, %s38
      %s39 = sphi 0, %s36
      %s40 = sphi 0, %s39
      %s56 = sphi 0, %s40
      %s60 = sphi 0, %s60
      %s62 = sphi 0, %s60
      %s63 = sphi 0, %s62
      %s77 = sphi 0, %s63
      %s81 = sphi 0, %s81
      %s83 = sphi 0, %s81
      %s84 = sphi 0, %s83
      %s98 = sphi 0, %s84
      %s106 = sphi 0, %s108
      %s109 = sphi 0, %s106
      %s110 = sphi 0, %s109
      %s126 = sphi 0, %s110
    $region4: #{tpu_custom_call.1} parent=1 // loop_header_branch
      %15 = sbr.rel (%p13) target = $region8
    $region5: #{tpu_custom_call.1} parent=1 // loop_body
      %s17 = ssub.s32 %s12, 1
      %s18 = ssub.s32 %s12, 2
      %s25 = sadd.s32 1, %s20
      %p26 = scmp.ge.s32.totalorder %s25, 2
      %s27 = scalar_select %p26, 0, %s25
      %s28 = sadd.s32 1, %s19
      %s29 = scalar_select %p26, %s28, %s19
      %p30 = scmp.ge.s32.totalorder %s29, 2
      %s31 = scalar_select %p30, 0, %s29
      %s32 = ssub.s32 %s19, %s31
      %s33 = ssub.s32 %s20, %s27
      %s34 = sor.u32 %s32, %s33
      %p35 = scmp.eq.s32.totalorder %s34, 0
      %s37 = sadd.s32 %s36, 1
      %s38 = scalar_select %p35, %s36, %s37
      %p41 = pneg %p35
      %p42 = scmp.eq.s32.totalorder %s12, 3
      %p43 = por %p41, %p42
      %p44 = scmp.ne.s32.totalorder %s36, %s39
      %p45 = scmp.eq.s32.totalorder %s12, 0
      %p46 = por %p44, %p45
      %p47 = scmp.ne.s32.totalorder %s36, %s39
      %p48 = scmp.eq.s32.totalorder %s17, 3
      %p49 = por %p47, %p48
      %p50 = scmp.ne.s32.totalorder %s39, %s40
      %p51 = scmp.eq.s32.totalorder %s17, 0
      %p52 = por %p50, %p51
      %p53 = scmp.ne.s32.totalorder %s39, %s40
      %p54 = scmp.eq.s32.totalorder %s18, 3
      %p55 = por %p53, %p54
      %p57 = scmp.ne.s32.totalorder %s40, %s56
      %p58 = scmp.eq.s32.totalorder %s18, 0
      %p59 = por %p57, %p58
      %s61 = sadd.s32 %s60, 1
      %p64 = scmp.eq.s32.totalorder %s12, 3
      %p65 = scmp.ne.s32.totalorder %s60, %s62
      %p66 = scmp.eq.s32.totalorder %s12, 0
      %p67 = por %p65, %p66
      %p68 = scmp.ne.s32.totalorder %s60, %s62
      %p69 = scmp.eq.s32.totalorder %s17, 3
      %p70 = por %p68, %p69
      %p71 = scmp.ne.s32.totalorder %s62, %s63
      %p72 = scmp.eq.s32.totalorder %s17, 0
      %p73 = por %p71, %p72
      %p74 = scmp.ne.s32.totalorder %s62, %s63
      %p75 = scmp.eq.s32.totalorder %s18, 3
      %p76 = por %p74, %p75
      %p78 = scmp.ne.s32.totalorder %s63, %s77
      %p79 = scmp.eq.s32.totalorder %s18, 0
      %p80 = por %p78, %p79
      %s82 = sadd.s32 %s81, 1
      %p85 = scmp.eq.s32.totalorder %s12, 3
      %p86 = scmp.ne.s32.totalorder %s81, %s83
      %p87 = scmp.eq.s32.totalorder %s12, 0
      %p88 = por %p86, %p87
      %p89 = scmp.ne.s32.totalorder %s81, %s83
      %p90 = scmp.eq.s32.totalorder %s17, 3
      %p91 = por %p89, %p90
      %p92 = scmp.ne.s32.totalorder %s83, %s84
      %p93 = scmp.eq.s32.totalorder %s17, 0
      %p94 = por %p92, %p93
      %p95 = scmp.ne.s32.totalorder %s83, %s84
      %p96 = scmp.eq.s32.totalorder %s18, 3
      %p97 = por %p95, %p96
      %p99 = scmp.ne.s32.totalorder %s84, %s98
      %p100 = scmp.eq.s32.totalorder %s18, 0
      %p101 = por %p99, %p100
      %s102 = ssub.s32 %s19, %s31
      %s103 = ssub.s32 %s20, %s27
      %s104 = sor.u32 %s102, %s103
      %p105 = scmp.eq.s32.totalorder %s104, 0
      %s107 = sadd.s32 %s106, 1
      %s108 = scalar_select %p105, %s106, %s107
      %p111 = pneg %p105
      %p112 = scmp.eq.s32.totalorder %s12, 3
      %p113 = por %p111, %p112
      %p114 = scmp.ne.s32.totalorder %s106, %s109
      %p115 = scmp.eq.s32.totalorder %s12, 0
      %p116 = por %p114, %p115
      %p117 = scmp.ne.s32.totalorder %s106, %s109
      %p118 = scmp.eq.s32.totalorder %s17, 3
      %p119 = por %p117, %p118
      %p120 = scmp.ne.s32.totalorder %s109, %s110
      %p121 = scmp.eq.s32.totalorder %s17, 0
      %p122 = por %p120, %p121
      %p123 = scmp.ne.s32.totalorder %s109, %s110
      %p124 = scmp.eq.s32.totalorder %s18, 3
      %p125 = por %p123, %p124
      %p127 = scmp.ne.s32.totalorder %s110, %s126
      %p128 = scmp.eq.s32.totalorder %s18, 0
      %p129 = por %p127, %p128
      %p130 = scmp.le.s32.totalorder 1, %s12
      %p131 = scmp.lt.s32.totalorder %s12, 5
      %p132 = pnand %p130, %p131
      %p133 = pneg %p132
      // Predicated region
      $region9: #{tpu_custom_call.1} parent=5 // pred_check
        _
      $region10: #{tpu_custom_call.1} parent=5 // pred_check_branch
        %135 = sbr.rel (%p132) target = $region12
      $region11: #{tpu_custom_call.1} parent=5 // pred_region
        %s136 = ssub.s32 %s12, 1
        // Predicated region
        $region13: #{tpu_custom_call.1} parent=11 // pred_check
          %p137 = pneg %p73
        $region14: #{tpu_custom_call.1} parent=11 // pred_check_branch
          %139 = sbr.rel (%p137) target = $region16
        $region15: #{tpu_custom_call.1} parent=11 // pred_region
          _
        $region16: #{tpu_custom_call.1} parent=11 // pred_fallthru
          _
        // Predicated region
        $region17: #{tpu_custom_call.1} parent=11 // pred_check
          %p140 = pneg %p94
        $region18: #{tpu_custom_call.1} parent=11 // pred_check_branch
          %142 = sbr.rel (%p140) target = $region20
        $region19: #{tpu_custom_call.1} parent=11 // pred_region
          _
        $region20: #{tpu_custom_call.1} parent=11 // pred_fallthru
          _
      $region12: #{tpu_custom_call.1} parent=5 // pred_fallthru
        _
      %p143 = scmp.lt.s32.totalorder %s12, 4
      // Predicated region
      $region21: #{tpu_custom_call.1} parent=5 // pred_check
        %p144 = pneg %p143
      $region22: #{tpu_custom_call.1} parent=5 // pred_check_branch
        %146 = sbr.rel (%p144) target = $region24
      $region23: #{tpu_custom_call.1} parent=5 // pred_region
        // Predicated region
        $region25: #{tpu_custom_call.1} parent=23 // pred_check
          %p147 = pneg %p46
        $region26: #{tpu_custom_call.1} parent=23 // pred_check_branch
          %149 = sbr.rel (%p147) target = $region28
        $region27: #{tpu_custom_call.1} parent=23 // pred_region
          %p150 = scmp.lt.s32.totalorder %s19, 1
          %s151 = scalar_select %p150, %s19, 1
          %p152 = scmp.lt.s32.totalorder %s20, 1
          %s153 = scalar_select %p152, %s20, 1
          %s154 = smul.addr %s153, 2
          %s155 = smul.addr %s151, 4
          %s156 = sadd.s32 %s154, %s155
          %s157 = smul.addr %s156, 4
          %s158 = scalar_lea.vmem %s0, %s157
        $region28: #{tpu_custom_call.1} parent=23 // pred_fallthru
          _
      $region24: #{tpu_custom_call.1} parent=5 // pred_fallthru
        _
      %p159 = scmp.le.s32.totalorder 1, %s12
      %p160 = scmp.lt.s32.totalorder %s12, 5
      %p161 = pnand %p159, %p160
      %p162 = pneg %p161
      // Predicated region
      $region29: #{tpu_custom_call.1} parent=5 // pred_check
        _
      $region30: #{tpu_custom_call.1} parent=5 // pred_check_branch
        %164 = sbr.rel (%p161) target = $region32
      $region31: #{tpu_custom_call.1} parent=5 // pred_region
        %s165 = ssub.s32 %s12, 1
        %p166 = scmp.lt.s32.totalorder %s21, 1
        %s167 = scalar_select %p166, %s21, 1
        %p168 = scmp.lt.s32.totalorder %s22, 1
        %s169 = scalar_select %p168, %s22, 1
        %s170 = smul.addr %s169, 2
        %s171 = smul.addr %s167, 4
        %s172 = sadd.s32 %s170, %s171
        %s173 = smul.addr %s172, 4
        %s174 = scalar_lea.vmem %s0, %s173
        %p175 = pneg %p52
        %p176 = pneg %p49
        %p177 = pneg %p73
        %p178 = pneg %p70
        %p179 = pneg %p94
        %p180 = pneg %p91
        %p181 = pneg %p122
        %p182 = pneg %p119
        %s183 = sand.u32 %s109, 1
        %s184 = scalar_lea.sflag [#allocation3], %s183
        %s185 = sand.u32 %s109, 1
        %s186 = smul.addr %s185, 32
        %s187 = scalar_lea.vmem [#allocation2], %s186
        %p188 = scmp.lt.s32.totalorder %s21, 1
        %s189 = scalar_select %p188, %s21, 1
        %p190 = scmp.lt.s32.totalorder %s22, 1
        %s191 = scalar_select %p190, %s22, 1
        %s192 = smul.addr %s191, 2
        %s193 = smul.addr %s189, 4
        %s194 = sadd.s32 %s192, %s193
        %s195 = smul.addr %s194, 4
        %s196 = scalar_lea.vmem %s0, %s195
        %v197 = vld [vmem:[%s196] sm:$0x77]
        %v198 = vlaneseq
        %v199 = vand.u32 %v198, 127
        %vm200 = vcmp.lt.s32.totalorder %v199, 0
        %v201 = vsub.s32 0, %v199
        %v202 = vsel %vm200, %v201, %v199
        %v203 = vshrl.u32 %v202, 4
        %v204 = vand.u32 %v202, 15
        %v205 = vsub.s32 0, %v204
        %v206 = vsel %vm200, %v205, %v204
        %vm207 = vcmp.ne.s32.totalorder %v206, 0
        %vm208 = vcmp.lt.s32.totalorder %v206, 0
        %vm209 = vmand %vm208, %vm207
        %v210 = vadd.s32 %v206, 16
        %v211 = vsel %vm209, %v210, %v206
        %v212 = vadd.s32 %v211, 4294967294
        %vm213 = vcmp.ge.s32.totalorder %v212, 0
        %vm214 = vcmp.lt.s32.totalorder %v212, 16
        %vm215 = vmand %vm213, %vm214
        %v216 = vsel %vm215, 1, 0
        %v217 = vcvt.s32.f32 %v216
        %v218 = vadd.s32 %v211, 4294967295
        %vm219 = vcmp.ge.s32.totalorder %v218, 0
        %vm220 = vcmp.lt.s32.totalorder %v218, 16
        %vm221 = vmand %vm219, %vm220
        %v222 = vsel %vm221, 1, 0
        %v223 = vcvt.s32.f32 %v222
        %v224 = vadd.s32 %v211, 1
        %vm225 = vcmp.ge.s32.totalorder %v224, 0
        %vm226 = vcmp.lt.s32.totalorder %v224, 16
        %vm227 = vmand %vm225, %vm226
        %v228 = vsel %vm227, 1, 0
        %v229 = vcvt.s32.f32 %v228
        %v230 = vadd.s32 %v211, 2
        %vm231 = vcmp.ge.s32.totalorder %v230, 0
        %vm232 = vcmp.lt.s32.totalorder %v230, 16
        %vm233 = vmand %vm231, %vm232
        %v234 = vsel %vm233, 1, 0
        %v235 = vcvt.s32.f32 %v234
        %v236 = vmul.f32 %v197, -0.25
        %v237 = vmul.f32 %v197, 0.5
        %239 = vrot.lane.b32.xlu0 %v237, 112
        %v240 = vpop.permute.xlu0 %239
        %v241 = vrot.slane %v240, 4
        %vm242 = vcmask 916480
        %v243 = vsel %vm242, %v240, %v241
        %v245 = vadd.f32 %v236, %v243
        %247 = vrot.lane.b32.xlu0 %v236, 96
        %v248 = vpop.permute.xlu0 %247
        %v249 = vrot.slane %v248, 4
        %vm250 = vcmask 785408
        %v251 = vsel %vm250, %v248, %v249
        %v253 = vadd.f32 %v245, %v251
        %255 = vrot.lane.b32.xlu0 %v223, 17
        %v256 = vpop.permute.xlu0 %255
        %v257 = vrot.slane %v256, 4
        %vm258 = vcmask 138240
        %v259 = vsel %vm258, %v257, %v256
        %v261 = vmul.f32 %v253, %v259
        %v262 = vmul.f32 %v197, -1.0
        %264 = vrot.lane.b32.xlu0 %v262, 112
        %v265 = vpop.permute.xlu0 %264
        %v266 = vrot.slane %v265, 4
        %v267 = vsel %vm242, %v265, %v266
        %v269 = vadd.f32 %v237, %v267
        %270 = vrot.lane.b32.xlu0 %v237, 96
        %v271 = vpop.permute.xlu0 %270
        %v272 = vrot.slane %v271, 4
        %v273 = vsel %vm250, %v271, %v272
        %v275 = vadd.f32 %v269, %v273
        %277 = vrot.lane.b32.xlu0 %v275, 127
        %v278 = vpop.permute.xlu0 %277
        %v279 = vrot.slane %v278, 4
        %vm280 = vcmask 1039360
        %v281 = vsel %vm280, %v278, %v279
        %v283 = vadd.f32 %v261, %v281
        %285 = vrot.lane.b32.xlu0 %v229, 19
        %v286 = vpop.permute.xlu0 %285
        %v287 = vrot.slane %v286, 4
        %vm288 = vcmask 154624
        %v289 = vsel %vm288, %v287, %v286
        %v291 = vmul.f32 %v253, %v289
        %293 = vrot.lane.b32.xlu0 %v291, 126
        %v294 = vpop.permute.xlu0 %293
        %v295 = vrot.slane %v294, 4
        %vm296 = vcmask 1031168
        %v297 = vsel %vm296, %v294, %v295
        %v299 = vadd.f32 %v283, %v297
        %v300 = vmax.f32 %v299, -3.0
        %v301 = vmin.f32 %v300, 3.0
        %v302 = vmul.f32 %v197, -0.083333336
        %v303 = vmul.f32 %v197, 0.16666667
        %305 = vrot.lane.b32.xlu0 %v303, 112
        %v306 = vpop.permute.xlu0 %305
        %v307 = vrot.slane %v306, 4
        %v308 = vsel %vm242, %v306, %v307
        %v310 = vadd.f32 %v302, %v308
        %v311 = vmul.f32 %v197, -0.16666667
        %313 = vrot.lane.b32.xlu0 %v311, 96
        %v314 = vpop.permute.xlu0 %313
        %v315 = vrot.slane %v314, 4
        %v316 = vsel %vm250, %v314, %v315
        %v318 = vadd.f32 %v310, %v316
        %319 = vrot.lane.b32.xlu0 %v303, 80
        %v320 = vpop.permute.xlu0 %319
        %v321 = vrot.slane %v320, 4
        %vm322 = vcmask 654336
        %v323 = vsel %vm322, %v320, %v321
        %v325 = vadd.f32 %v318, %v323
        %327 = vrot.lane.b32.xlu0 %v302, 64
        %v328 = vpop.permute.xlu0 %327
        %v329 = vrot.slane %v328, 4
        %vm330 = vcmask 523264
        %v331 = vsel %vm330, %v328, %v329
        %v333 = vadd.f32 %v325, %v331
        %v334 = vmul.f32 %v333, %v217
        %v335 = vmul.f32 %v197, -0.5
        %337 = vrot.lane.b32.xlu0 %v335, 112
        %v338 = vpop.permute.xlu0 %337
        %v339 = vrot.slane %v338, 4
        %v340 = vsel %vm242, %v338, %v339
        %v342 = vadd.f32 %v303, %v340
        %v343 = vmul.f32 %v197, 0.6666667
        %345 = vrot.lane.b32.xlu0 %v343, 96
        %v346 = vpop.permute.xlu0 %345
        %v347 = vrot.slane %v346, 4
        %v348 = vsel %vm250, %v346, %v347
        %v350 = vadd.f32 %v342, %v348
        %351 = vrot.lane.b32.xlu0 %v335, 80
        %v352 = vpop.permute.xlu0 %351
        %v353 = vrot.slane %v352, 4
        %v354 = vsel %vm322, %v352, %v353
        %v356 = vadd.f32 %v350, %v354
        %357 = vrot.lane.b32.xlu0 %v303, 64
        %v358 = vpop.permute.xlu0 %357
        %v359 = vrot.slane %v358, 4
        %v360 = vsel %vm330, %v358, %v359
        %v362 = vadd.f32 %v356, %v360
        %363 = vrot.lane.b32.xlu0 %v223, 1
        %v364 = vpop.permute.xlu0 %363
        %v365 = vrot.slane %v364, 4
        %vm366 = vcmask 7168
        %v367 = vsel %vm366, %v365, %v364
        %v369 = vmul.f32 %v362, %v367
        %371 = vrot.lane.b32.xlu0 %v369, 127
        %v372 = vpop.permute.xlu0 %371
        %v373 = vrot.slane %v372, 4
        %v374 = vsel %vm280, %v372, %v373
        %v376 = vadd.f32 %v334, %v374
        %377 = vrot.lane.b32.xlu0 %v343, 112
        %v378 = vpop.permute.xlu0 %377
        %v379 = vrot.slane %v378, 4
        %v380 = vsel %vm242, %v378, %v379
        %v382 = vadd.f32 %v311, %v380
        %383 = vrot.lane.b32.xlu0 %v262, 96
        %v384 = vpop.permute.xlu0 %383
        %v385 = vrot.slane %v384, 4
        %v386 = vsel %vm250, %v384, %v385
        %v388 = vadd.f32 %v382, %v386
        %389 = vrot.lane.b32.xlu0 %v343, 80
        %v390 = vpop.permute.xlu0 %389
        %v391 = vrot.slane %v390, 4
        %v392 = vsel %vm322, %v390, %v391
        %v394 = vadd.f32 %v388, %v392
        %395 = vrot.lane.b32.xlu0 %v311, 64
        %v396 = vpop.permute.xlu0 %395
        %v397 = vrot.slane %v396, 4
        %v398 = vsel %vm330, %v396, %v397
        %v400 = vadd.f32 %v394, %v398
        %402 = vrot.lane.b32.xlu0 %v400, 126
        %v403 = vpop.permute.xlu0 %402
        %v404 = vrot.slane %v403, 4
        %v405 = vsel %vm296, %v403, %v404
        %v407 = vadd.f32 %v376, %v405
        %408 = vrot.lane.b32.xlu0 %v229, 3
        %v409 = vpop.permute.xlu0 %408
        %v410 = vrot.slane %v409, 4
        %vm411 = vcmask 23552
        %v412 = vsel %vm411, %v410, %v409
        %v414 = vmul.f32 %v362, %v412
        %416 = vrot.lane.b32.xlu0 %v414, 125
        %v417 = vpop.permute.xlu0 %416
        %v418 = vrot.slane %v417, 4
        %vm419 = vcmask 1022976
        %v420 = vsel %vm419, %v417, %v418
        %v422 = vadd.f32 %v407, %v420
        %424 = vrot.lane.b32.xlu0 %v235, 4
        %v425 = vpop.permute.xlu0 %424
        %v426 = vrot.slane %v425, 4
        %vm427 = vcmask 31744
        %v428 = vsel %vm427, %v426, %v425
        %v430 = vmul.f32 %v333, %v428
        %432 = vrot.lane.b32.xlu0 %v430, 124
        %v433 = vpop.permute.xlu0 %432
        %v434 = vrot.slane %v433, 4
        %vm435 = vcmask 1014784
        %v436 = vsel %vm435, %v433, %v434
        %v438 = vadd.f32 %v422, %v436
        %v439 = vmax.f32 %v438, -3.0
        %v440 = vmin.f32 %v439, 3.0
        %441 = vrot.lane.b32.xlu0 %v223, 33
        %v442 = vpop.permute.xlu0 %441
        %v443 = vrot.slane %v442, 4
        %vm444 = vcmask 269312
        %v445 = vsel %vm444, %v443, %v442
        %v447 = vmul.f32 %v237, %v445
        %448 = vrot.lane.b32.xlu0 %v262, 127
        %v449 = vpop.permute.xlu0 %448
        %v450 = vrot.slane %v449, 4
        %v451 = vsel %vm280, %v449, %v450
        %v453 = vadd.f32 %v447, %v451
        %454 = vrot.lane.b32.xlu0 %v229, 35
        %v455 = vpop.permute.xlu0 %454
        %v456 = vrot.slane %v455, 4
        %vm457 = vcmask 285696
        %v458 = vsel %vm457, %v456, %v455
        %v460 = vmul.f32 %v237, %v458
        %462 = vrot.lane.b32.xlu0 %v460, 126
        %v463 = vpop.permute.xlu0 %462
        %v464 = vrot.slane %v463, 4
        %v465 = vsel %vm296, %v463, %v464
        %v467 = vadd.f32 %v453, %v465
        %v468 = vmax.f32 %v467, -3.0
        %v469 = vmin.f32 %v468, 3.0
        %v470 = vld [vmem:[%s1] sm:$0xff]
        %v471 = vld [vmem:[%s1 + $0x8] sm:$0xff]
        %v472 = vld [vmem:[%s1 + $0x10] sm:$0xff]
        %v473 = vld [vmem:[%s1 + $0x18] sm:$0xff]
        %478 = vrot.lane.b32.xlu0 %v470, 125
        %v479 = vpop.permute.xlu0 %478
        %480 = vrot.lane.b32.xlu0 %v471, 125
        %v481 = vpop.permute.xlu0 %480
        %482 = vrot.lane.b32.xlu0 %v472, 125
        %v483 = vpop.permute.xlu0 %482
        %484 = vrot.lane.b32.xlu0 %v473, 125
        %v485 = vpop.permute.xlu0 %484
        %v486 = vsel %vm411, %v479, 0
        %v488 = vsel %vm411, %v481, 0
        %v490 = vsel %vm411, %v483, 0
        %v492 = vsel %vm411, %v485, 0
        %vm494 = vcmask 1042432
        %v496 = vsel %vm494, %v440, 0
        %498 = vmatpush.msra.mxu0 0.0
        %499 = vmatpush.msra.mxu0 0.0
        %500 = vmatpush.msra.mxu0 0.0
        %501 = vmatpush.msra.mxu0 0.0
        %502 = vmatpush.msra.mxu0 0.0
        %503 = vmatpush.msra.mxu0 0.0
        %504 = vmatpush.msra.mxu0 0.0
        %505 = vmatpush.msra.mxu0 0.0
        %506 = vmatpush.msra.mxu0 0.0
        %507 = vmatpush.msra.mxu0 0.0
        %508 = vmatpush.msra.mxu0 0.0
        %509 = vmatpush.msra.mxu0 0.0
        %510 = vmatpush.msra.mxu0 0.0
        %511 = vmatpush.msra.mxu0 0.0
        %512 = vmatpush.msra.mxu0 0.0
        %513 = vmatpush.msra.mxu0 %v496
        %514 = vmatmul.f32.gmra.mxu0 %v486
        %v515 = vpop.f32.mrf.mxu0
        %v516 = vadd.f32 0.0, %v515
        %517 = vmatmul.f32.gmra.mxu0 %v488
        %v518 = vpop.f32.mrf.mxu0
        %v519 = vadd.f32 0.0, %v518
        %520 = vmatmul.f32.gmra.mxu0 %v490
        %v521 = vpop.f32.mrf.mxu0
        %v522 = vadd.f32 0.0, %v521
        %523 = vmatmul.f32.gmra.mxu0 %v492
        %v524 = vpop.f32.mrf.mxu0
        %v525 = vadd.f32 0.0, %v524
        %526 = vdwg.mxu0
        %528 = vst [vmem:[#allocation1] ss:$2 sm:$0xff] %v301
        %v529 = vld.sshfl [vmem:[#allocation1] sm:$0xff pattern:$0x75316420]
        %v530 = vld.sshfl [vmem:[#allocation1 + $0x8] sm:$0xff pattern:$0x75316420]
        %531 = vrot.lane.b32.xlu0 %v529, 111
        %v532 = vpop.permute.xlu0 %531
        %533 = vrot.lane.b32.xlu0 %v530, 111
        %v534 = vpop.permute.xlu0 %533
        %vm535 = vcmask 908288
        %v536 = vsel %vm535, %v532, %v534
        %v537 = vsel %vm411, %v470, 0
        %v539 = vsel %vm411, %v471, 0
        %v541 = vsel %vm411, %v472, 0
        %v543 = vsel %vm411, %v473, 0
        %v545 = vsel %vm494, %v536, 0
        %547 = vmatpush.msra.mxu0 0.0
        %548 = vmatpush.msra.mxu0 0.0
        %549 = vmatpush.msra.mxu0 0.0
        %550 = vmatpush.msra.mxu0 0.0
        %551 = vmatpush.msra.mxu0 0.0
        %552 = vmatpush.msra.mxu0 0.0
        %553 = vmatpush.msra.mxu0 0.0
        %554 = vmatpush.msra.mxu0 0.0
        %555 = vmatpush.msra.mxu0 0.0
        %556 = vmatpush.msra.mxu0 0.0
        %557 = vmatpush.msra.mxu0 0.0
        %558 = vmatpush.msra.mxu0 0.0
        %559 = vmatpush.msra.mxu0 0.0
        %560 = vmatpush.msra.mxu0 0.0
        %561 = vmatpush.msra.mxu0 0.0
        %562 = vmatpush.msra.mxu0 %v545
        %563 = vmatmul.f32.gmra.mxu0 %v537
        %v564 = vpop.f32.mrf.mxu0
        %v565 = vadd.f32 %v516, %v564
        %566 = vmatmul.f32.gmra.mxu0 %v539
        %v567 = vpop.f32.mrf.mxu0
        %v568 = vadd.f32 %v519, %v567
        %569 = vmatmul.f32.gmra.mxu0 %v541
        %v570 = vpop.f32.mrf.mxu0
        %v571 = vadd.f32 %v522, %v570
        %572 = vmatmul.f32.gmra.mxu0 %v543
        %v573 = vpop.f32.mrf.mxu0
        %v574 = vadd.f32 %v525, %v573
        %575 = vdwg.mxu0
        %576 = vrot.lane.b32.xlu0 %v470, 122
        %v577 = vpop.permute.xlu0 %576
        %578 = vrot.lane.b32.xlu0 %v471, 122
        %v579 = vpop.permute.xlu0 %578
        %580 = vrot.lane.b32.xlu0 %v472, 122
        %v581 = vpop.permute.xlu0 %580
        %582 = vrot.lane.b32.xlu0 %v473, 122
        %v583 = vpop.permute.xlu0 %582
        %585 = vst [vmem:[#allocation1] ss:$2 sm:$0xff] %v469
        %v586 = vld.sshfl [vmem:[#allocation1] sm:$0xff pattern:$0x75316420]
        %v587 = vld.sshfl [vmem:[#allocation1 + $0x8] sm:$0xff pattern:$0x75316420]
        %588 = vrot.lane.b32.xlu0 %v586, 95
        %v589 = vpop.permute.xlu0 %588
        %590 = vrot.lane.b32.xlu0 %v587, 95
        %v591 = vpop.permute.xlu0 %590
        %vm592 = vcmask 777216
        %v593 = vsel %vm592, %v589, %v591
        %v594 = vsel %vm411, %v577, 0
        %v596 = vsel %vm411, %v579, 0
        %v598 = vsel %vm411, %v581, 0
        %v600 = vsel %vm411, %v583, 0
        %v602 = vsel %vm494, %v593, 0
        %604 = vmatpush.msra.mxu0 0.0
        %605 = vmatpush.msra.mxu0 0.0
        %606 = vmatpush.msra.mxu0 0.0
        %607 = vmatpush.msra.mxu0 0.0
        %608 = vmatpush.msra.mxu0 0.0
        %609 = vmatpush.msra.mxu0 0.0
        %610 = vmatpush.msra.mxu0 0.0
        %611 = vmatpush.msra.mxu0 0.0
        %612 = vmatpush.msra.mxu0 0.0
        %613 = vmatpush.msra.mxu0 0.0
        %614 = vmatpush.msra.mxu0 0.0
        %615 = vmatpush.msra.mxu0 0.0
        %616 = vmatpush.msra.mxu0 0.0
        %617 = vmatpush.msra.mxu0 0.0
        %618 = vmatpush.msra.mxu0 0.0
        %619 = vmatpush.msra.mxu0 %v602
        %620 = vmatmul.f32.gmra.mxu0 %v594
        %v621 = vpop.f32.mrf.mxu0
        %v622 = vadd.f32 0.0, %v621
        %623 = vmatmul.f32.gmra.mxu0 %v596
        %v624 = vpop.f32.mrf.mxu0
        %v625 = vadd.f32 0.0, %v624
        %626 = vmatmul.f32.gmra.mxu0 %v598
        %v627 = vpop.f32.mrf.mxu0
        %v628 = vadd.f32 0.0, %v627
        %629 = vmatmul.f32.gmra.mxu0 %v600
        %v630 = vpop.f32.mrf.mxu0
        %v631 = vadd.f32 0.0, %v630
        %632 = vdwg.mxu0
        %v633 = vadd.f32 %v565, %v622
        %v634 = vadd.f32 %v568, %v625
        %v635 = vadd.f32 %v571, %v628
        %v636 = vadd.f32 %v574, %v631
        %v637 = vld [vmem:[%s2] sm:$0xff]
        %v638 = vld [vmem:[%s2 + $0x8] sm:$0xff]
        %v639 = vld [vmem:[%s2 + $0x10] sm:$0xff]
        %v640 = vld [vmem:[%s2 + $0x18] sm:$0xff]
        %642 = vset.pattern.permute.xlu0 0
        %643 = vperm.xlu0 %642, %v637
        %v644 = vpop.permute.xlu0 %643
        %647 = vset.pattern.permute.xlu0 0
        %648 = vperm.xlu0 %647, %v638
        %v649 = vpop.permute.xlu0 %648
        %652 = vset.pattern.permute.xlu0 0
        %653 = vperm.xlu0 %652, %v639
        %v654 = vpop.permute.xlu0 %653
        %657 = vset.pattern.permute.xlu0 0
        %658 = vperm.xlu0 %657, %v640
        %v659 = vpop.permute.xlu0 %658
        %v661 = vadd.f32 %v633, %v644
        %v662 = vadd.f32 %v634, %v649
        %v663 = vadd.f32 %v635, %v654
        %v664 = vadd.f32 %v636, %v659
        %v665 = vmax.f32 %v661, 0.0
        %v666 = vmax.f32 %v662, 0.0
        %v667 = vmax.f32 %v663, 0.0
        %v668 = vmax.f32 %v664, 0.0
        %669 = vst [vmem:[%s187] sm:$0xff] %v665
        %670 = vst [vmem:[%s187 + $0x8] sm:$0xff] %v666
        %671 = vst [vmem:[%s187 + $0x10] sm:$0xff] %v667
        %672 = vst [vmem:[%s187 + $0x18] sm:$0xff] %v668
        %s673 = sand.u32 %s109, 1
        %s674 = scalar_lea.sflag [#allocation3], %s673
        %s675 = sand.u32 %s109, 1
        %s676 = smul.addr %s675, 32
        %s677 = scalar_lea.vmem [#allocation2], %s676
        // Predicated region
        $region33: #{tpu_custom_call.1} parent=31 // pred_check
          %p678 = pneg %p119
        $region34: #{tpu_custom_call.1} parent=31 // pred_check_branch
          %680 = sbr.rel (%p678) target = $region36
        $region35: #{tpu_custom_call.1} parent=31 // pred_region
          %682 = vsyncadd %s674, 0
          %s683 = smul.addr %s21, 8
          %s684 = sadd.s32 %s22, %s683
          %s685 = smul.addr %s684, 8
          %s686 = scalar_lea.hbm %s3, %s685
          %s687 = sshll.u32 %s677, 4
          %s688 = int_to_ptr.vmem [resolvable:$true] %s687
          %s689 = sshll.u32 %s686, 4
          %s690 = int_to_ptr.hbm [resolvable:$true] %s689
          %695 = dma.vmem_to_hbm [thread:$0]  %s688, 512, %s690, %s674, 128, 256, 8
        $region36: #{tpu_custom_call.1} parent=31 // pred_fallthru
          _
      $region32: #{tpu_custom_call.1} parent=5 // pred_fallthru
        _
      %p696 = scmp.le.s32.totalorder 2, %s12
      // Predicated region
      $region37: #{tpu_custom_call.1} parent=5 // pred_check
        %p697 = pneg %p696
      $region38: #{tpu_custom_call.1} parent=5 // pred_check_branch
        %699 = sbr.rel (%p697) target = $region40
      $region39: #{tpu_custom_call.1} parent=5 // pred_region
        %s700 = ssub.s32 %s12, 2
        // Predicated region
        $region41: #{tpu_custom_call.1} parent=39 // pred_check
          %p701 = pneg %p125
        $region42: #{tpu_custom_call.1} parent=39 // pred_check_branch
          %703 = sbr.rel (%p701) target = $region44
        $region43: #{tpu_custom_call.1} parent=39 // pred_region
          %s704 = sand.u32 %s110, 1
          %s705 = scalar_lea.sflag [#allocation3], %s704
          %s706 = sand.u32 %s110, 1
          %s707 = smul.addr %s706, 32
          %s708 = scalar_lea.vmem [#allocation2], %s707
          %710 = dma.done %s705, 512
        $region44: #{tpu_custom_call.1} parent=39 // pred_fallthru
          _
      $region40: #{tpu_custom_call.1} parent=5 // pred_fallthru
        _
    $region6: #{tpu_custom_call.1} parent=1 // loop_footer
      %s16 = sadd.s32 1, %s12
    $region7: #{tpu_custom_call.1} parent=1 // loop_footer_branch
      %11 = sbr.rel target = $region3
    $region8: #{tpu_custom_call.1} parent=1 // loop_exit
      _
    %711 = vsyncpa [#allocation3], 1
    %s712 = scalar_lea.sflag [#allocation3], 1
    %713 = vsyncpa %s712, 1

</llo_original>
